<compile_context>
chip_gen: v5e
topology: v5e:2x2
jax: 0.10.0
libtpu: 0.0.40
codegen_flags: <defaults>
</compile_context>

<pallas_src>
import jax
import jax.numpy as jnp
from jax.experimental import pallas as pl
from jax.experimental.pallas import tpu as pltpu


_LANE = 128     # output last dim padded to a multiple of this (lane-dense stores)
_TM_MAX = 512   # max rows per MXU tile (measured ~85% HBM roofline at 512 vs 63% @256)


def _round_up(x, m):
    return ((x + m - 1) // m) * m


def _round_down(x, m):
    return (x // m) * m


def _physical_vmem_budget():
    """Per-generation scoped-VMEM ceiling: physical VMEM minus headroom."""
    phys = 64 << 20  # conservative fallback == smallest per-TC VMEM (v7x)
    try:
        phys = int(pltpu.get_tpu_info().vmem_capacity_bytes)
    except Exception:
        pass
    return phys - (8 << 20)


def _vmem_limit(need_bytes, budget):
    """Explicit scoped-VMEM limit: required bytes + headroom, clamped to physical.

    Always an int (never None) so v5e's 16 MiB *default* scoped limit can never
    silently reject moderately sized tiles, and v7x's 64 MiB physical ceiling is
    never exceeded.
    """
    need = int(need_bytes) + (8 << 20)       # headroom for compiler-internal scratch
    return int(min(max(need, 16 << 20), budget))


def _choose_rows(M, nf, twp, x_bytes, w_bytes, out_bytes, budget, row_align, w_bufs):
    """Row-tile size: multiple of row_align (or == M), <= _TM_MAX, fits the VMEM
    budget, and yields >= 2 grid steps when M is large enough (feeds both v7x TCs)."""
    resident = w_bufs * (nf * twp * w_bytes + twp * 4)     # weight + f32 bias buffers
    per_row = 2 * (nf * x_bytes + twp * out_bytes)         # double-buffered x/out rows
    avail = max(budget - resident - (8 << 20), 0)
    cap = min(_TM_MAX, _round_down(avail // per_row, row_align))
    cap = max(cap, row_align)
    if M < 2 * row_align:
        return M                     # single block == full array dim (always legal)
    tm = min(cap, _round_up(pl.cdiv(M, 2), row_align))
    return max(row_align, tm)


def _make_linear_kernel(compute_dtype):
    def kernel(x_ref, w_ref, b_ref, o_ref):
        # x_ref: (R, nf), w_ref: (nf, twp), b_ref: (1, twp), o_ref: (R, twp)
        x = x_ref[...]
        if compute_dtype is not None:
            # In-kernel cast: x stays in its original dtype in HBM (no extra pass),
            # only the VMEM tile feeding the MXU is converted.
            x = x.astype(compute_dtype)
        acc = jnp.dot(x, w_ref[...], preferred_element_type=jnp.float32)
        o_ref[...] = (acc + b_ref[...]).astype(o_ref.dtype)
    return kernel


def init_flatten_head_params(key, individual, n_vars, nf, target_window):
    kw, kb, kf = jax.random.split(key, 3)
    scale = 1.0 / (nf * target_window)
    if individual:
        w = jax.random.normal(kw, (n_vars, nf, target_window), jnp.float32) * 0.02
        b = jax.random.normal(kb, (n_vars, target_window), jnp.float32) * 0.02
    else:
        w = jax.random.normal(kw, (nf, target_window), jnp.float32) * 0.02
        b = jax.random.normal(kb, (target_window,), jnp.float32) * 0.02
    # Parameter exists in the PyTorch module but is unused by forward.
    weights_fft = scale * jax.random.uniform(kf, (nf, target_window), jnp.float32)
    return {"w": w, "b": b, "weights_FFT": weights_fft}


def flatten_head_forward(x, params, individual, compute_dtype=None):
    """Pallas forward of Flatten_Head.

    compute_dtype: optional (e.g. jnp.bfloat16) dtype feeding the MXU. x is kept
    in its original dtype in HBM and cast per-tile inside the kernel; only the
    small resident weight is cast outside. Accumulation and bias-add stay in
    float32; the output keeps x's original dtype.
    """
    bs, n_vars, d_model, patch_num = x.shape
    nf = d_model * patch_num
    out_dtype = x.dtype
    w = params["w"]
    b = params["b"]
    tw = w.shape[-1]
    twp = _round_up(tw, _LANE)  # lane-dense output width

    # TODO(synk): dropout is identity for head_dropout=0 / eval mode; training-mode
    # dropout would need pltpu.prng_* masking inside the kernel.

    if compute_dtype is not None:
        w = w.astype(compute_dtype)          # small / resident -> cast outside is cheap

    x_bytes = jnp.dtype(x.dtype).itemsize
    w_bytes = jnp.dtype(w.dtype).itemsize
    out_bytes = jnp.dtype(out_dtype).itemsize
    mxu_bytes = jnp.dtype(compute_dtype).itemsize if compute_dtype is not None else x_bytes
    row_align = 16 if min(mxu_bytes, out_bytes) < 4 else 8   # 16-bit packs 16 sublanes

    budget = _physical_vmem_budget()
    kernel = _make_linear_kernel(compute_dtype)

    if individual:
        # w: [n_vars, nf, tw], b: [n_vars, tw] -> pad last dim to twp (zeros sliced off).
        w_p = jnp.pad(w, ((0, 0), (0, 0), (0, twp - tw))) if twp != tw else w
        b_p = jnp.pad(b, ((0, 0), (0, twp - tw))) if twp != tw else b
        b_p = b_p.astype(jnp.float32).reshape(n_vars, 1, twp)

        # Tile the batch: n_vars outer (megacore-parallel), bs tiles inner so the
        # per-variable weight stays resident while batch rows stream through.
        tb = _choose_rows(bs, nf, twp, x_bytes, w_bytes, out_bytes, budget,
                          row_align, w_bufs=2)
        grid_b = pl.cdiv(bs, tb)

        if nf % _LANE == 0:
            # Zero-copy column-blocked view: variable i's features are columns
            # [i*nf, (i+1)*nf) -> contiguous DMA, no transpose of the activation.
            x_in = x.reshape(bs, n_vars * nf)
            x_spec = pl.BlockSpec((tb, nf), lambda i, j: (j, i))
        else:
            # TODO(synk): this fallback pays one extra HBM pass for the transpose
            # when nf is not a multiple of 128; a strided per-variable 3-D DMA
            # could remove it once that lowering is verified.
            x_in = x.reshape(bs, n_vars, nf).transpose(1, 0, 2)  # [n_vars, bs, nf]
            x_spec = pl.BlockSpec((None, tb, nf), lambda i, j: (i, j, 0))

        need = (2 * (nf * twp * w_bytes + twp * 4)          # double-buffered w/b (vary per var)
                + 2 * tb * (nf * x_bytes + twp * out_bytes))
        cost = pl.CostEstimate(
            flops=2 * bs * n_vars * nf * twp,
            transcendentals=0,
            bytes_accessed=(bs * n_vars * nf * x_bytes + n_vars * nf * twp * w_bytes
                            + n_vars * twp * 4 + bs * n_vars * twp * out_bytes),
        )
        out = pl.pallas_call(
            kernel,
            out_shape=jax.ShapeDtypeStruct((bs, n_vars * twp), out_dtype),
            grid_spec=pltpu.PrefetchScalarGridSpec(
                num_scalar_prefetch=0,
                grid=(n_vars, grid_b),
                in_specs=[
                    x_spec,
                    pl.BlockSpec((None, nf, twp), lambda i, j: (i, 0, 0)),
                    pl.BlockSpec((None, 1, twp), lambda i, j: (i, 0, 0)),
                ],
                out_specs=pl.BlockSpec((tb, twp), lambda i, j: (j, i)),
            ),
            compiler_params=pltpu.CompilerParams(
                dimension_semantics=("parallel", "arbitrary"),
                vmem_limit_bytes=_vmem_limit(need, budget),
            ),
            cost_estimate=cost,
        )(x_in, w_p, b_p)
        out = out.reshape(bs, n_vars, twp)
        return out[..., :tw] if twp != tw else out

    else:
        # Shared head: one (nf -> tw) linear over all bs*n_vars rows.
        w_p = jnp.pad(w, ((0, 0), (0, twp - tw))) if twp != tw else w
        b_p = jnp.pad(b, ((0, twp - tw),)) if twp != tw else b
        b_p = b_p.astype(jnp.float32).reshape(1, twp)

        M = bs * n_vars
        x2 = x.reshape(M, nf)  # zero-copy reshape; no host-side padding of x
        tm = _choose_rows(M, nf, twp, x_bytes, w_bytes, out_bytes, budget,
                          row_align, w_bufs=1)
        grid_m = pl.cdiv(M, tm)  # ragged last block masked by Pallas (K never tiled)

        # TODO(synk): if nf*twp*w_bytes alone approaches the VMEM budget (v7x 64 MiB),
        # K/N-tile the weight with an f32 accumulator + pl.when init/finalize and an
        # "arbitrary" K axis instead of relying on a larger limit.
        need = ((nf * twp * w_bytes + twp * 4)               # single-buffered w/b (resident)
                + 2 * tm * (nf * x_bytes + twp * out_bytes))
        cost = pl.CostEstimate(
            flops=2 * M * nf * twp,
            transcendentals=0,
            bytes_accessed=(M * nf * x_bytes + nf * twp * w_bytes + twp * 4
                            + M * twp * out_bytes),
        )
        out = pl.pallas_call(
            kernel,
            out_shape=jax.ShapeDtypeStruct((M, twp), out_dtype),
            grid_spec=pltpu.PrefetchScalarGridSpec(
                num_scalar_prefetch=0,
                grid=(grid_m,),
                in_specs=[
                    pl.BlockSpec((tm, nf), lambda i: (i, 0)),
                    # Constant index_map -> resident across the grid; a second buffer
                    # would be pure VMEM waste, so single-buffer it.
                    pl.BlockSpec((nf, twp), lambda i: (0, 0),
                                 pipeline_mode=pl.Buffered(1)),
                    pl.BlockSpec((1, twp), lambda i: (0, 0),
                                 pipeline_mode=pl.Buffered(1)),
                ],
                out_specs=pl.BlockSpec((tm, twp), lambda i: (i, 0)),
            ),
            compiler_params=pltpu.CompilerParams(
                dimension_semantics=("parallel",),
                vmem_limit_bytes=_vmem_limit(need, budget),
            ),
            cost_estimate=cost,
        )(x2, w_p, b_p)
        out = out[:, :tw] if twp != tw else out
        return out.reshape(bs, n_vars, tw)


def _reference(x, params, individual):
    bs, n_vars, d_model, patch_num = x.shape
    nf = d_model * patch_num
    xf = x.reshape(bs, n_vars, nf)
    if individual:
        return jnp.einsum("bvk,vkt->bvt", xf, params["w"]) + params["b"][None, :, :]
    else:
        return xf @ params["w"] + params["b"]


if __name__ == "__main__":
    key = jax.random.PRNGKey(0)
    kx, kp1, kp2 = jax.random.split(key, 3)

    bs, n_vars, d_model, patch_num = 2, 4, 16, 16
    nf = d_model * patch_num           # 256
    target_window = 32

    x = jax.random.normal(kx, (bs, n_vars, d_model, patch_num), jnp.float32)

    # ---- Shared-head path (individual=False), f32 ----
    params_shared = init_flatten_head_params(kp1, False, n_vars, nf, target_window)
    y_shared = flatten_head_forward(x, params_shared, individual=False)
    jax.block_until_ready(y_shared)
    ref_shared = _reference(x, params_shared, False)
    assert y_shared.shape == (bs, n_vars, target_window)
    assert jnp.allclose(y_shared, ref_shared, atol=1e-4, rtol=1e-4)

    # ---- Per-variable path (individual=True), f32 ----
    params_ind = init_flatten_head_params(kp2, True, n_vars, nf, target_window)
    y_ind = flatten_head_forward(x, params_ind, individual=True)
    jax.block_until_ready(y_ind)
    ref_ind = _reference(x, params_ind, True)
    assert y_ind.shape == (bs, n_vars, target_window)
    assert jnp.allclose(y_ind, ref_ind, atol=1e-4, rtol=1e-4)

    # ---- bf16 compute (in-kernel cast of x, f32 accumulation), both paths ----
    y_shared_bf16 = flatten_head_forward(
        x, params_shared, individual=False, compute_dtype=jnp.bfloat16)
    jax.block_until_ready(y_shared_bf16)
    assert y_shared_bf16.shape == (bs, n_vars, target_window)
    assert jnp.allclose(y_shared_bf16, ref_shared, atol=5e-2, rtol=5e-2)

    y_ind_bf16 = flatten_head_forward(
        x, params_ind, individual=True, compute_dtype=jnp.bfloat16)
    jax.block_until_ready(y_ind_bf16)
    assert y_ind_bf16.shape == (bs, n_vars, target_window)
    assert jnp.allclose(y_ind_bf16, ref_ind, atol=5e-2, rtol=5e-2)

    print("KERNEL_OK")
</pallas_src>

<mosaic_0001>
module attributes {stable_mosaic.version = 11 : i64} {
  func.func @kernel(%arg0: i32, %arg1: memref<8x256xf32, #tpu.memory_space<vmem>>, %arg2: memref<256x128xf32, #tpu.memory_space<vmem>>, %arg3: memref<1x128xf32, #tpu.memory_space<vmem>>, %arg4: memref<8x128xf32, #tpu.memory_space<vmem>>) attributes {dimension_semantics = [#tpu.dimension_semantics<parallel>], iteration_bounds = array<i64: 1>, scalar_prefetch = 0 : i64, scratch_operands = 0 : i64, tpu.core_type = #tpu.core_type<tc>, window_params = [{transform_indices = @transform_0, window_bounds = array<i64: 8, 256>}, {pipeline_mode = #tpu.pipeline_mode<synchronous>, transform_indices = @transform_1, window_bounds = array<i64: 256, 128>}, {pipeline_mode = #tpu.pipeline_mode<synchronous>, transform_indices = @transform_2, window_bounds = array<i64: 1, 128>}, {transform_indices = @transform_3, window_bounds = array<i64: 8, 128>}]} {
    %c0 = arith.constant 0 : index
    %c0_0 = arith.constant 0 : index
    %0 = vector.load %arg1[%c0, %c0_0] : memref<8x256xf32, #tpu.memory_space<vmem>>, vector<8x256xf32>
    %c0_1 = arith.constant 0 : index
    %c0_2 = arith.constant 0 : index
    %1 = vector.load %arg2[%c0_1, %c0_2] : memref<256x128xf32, #tpu.memory_space<vmem>>, vector<256x128xf32>
    %cst = arith.constant dense<0.000000e+00> : vector<8x128xf32>
    %2 = tpu.matmul %0, %1, %cst {dimension_numbers = #tpu.dot_dimension_numbers<[1], [0], [0], [1], [0, 0, 1, 1], [], []>} : vector<8x256xf32>, vector<256x128xf32>, vector<8x128xf32> -> vector<8x128xf32>
    %c0_3 = arith.constant 0 : index
    %c0_4 = arith.constant 0 : index
    %3 = vector.load %arg3[%c0_3, %c0_4] : memref<1x128xf32, #tpu.memory_space<vmem>>, vector<1x128xf32>
    %4 = vector.broadcast %3 : vector<1x128xf32> to vector<8x128xf32>
    %5 = arith.addf %2, %4 : vector<8x128xf32>
    %c0_5 = arith.constant 0 : index
    %c0_6 = arith.constant 0 : index
    %6 = vector.load %arg4[%c0_5, %c0_6] : memref<8x128xf32, #tpu.memory_space<vmem>>, vector<8x128xf32>
    tpu.vector_store %arg4[%c0_5, %c0_6], %5 {strides = array<i32>} : memref<8x128xf32, #tpu.memory_space<vmem>>, vector<8x128xf32>,
    return
  }
  func.func @transform_0(%arg0: i32) -> (i32, i32) {
    %c0_i32 = arith.constant 0 : i32
    %c0_i32_0 = arith.constant 0 : i32
    return %arg0, %c0_i32 : i32, i32
  }
  func.func @transform_1(%arg0: i32) -> (i32, i32) {
    %c0_i32 = arith.constant 0 : i32
    %c0_i32_0 = arith.constant 0 : i32
    %c0_i32_1 = arith.constant 0 : i32
    return %c0_i32, %c0_i32_0 : i32, i32
  }
  func.func @transform_2(%arg0: i32) -> (i32, i32) {
    %c0_i32 = arith.constant 0 : i32
    %c0_i32_0 = arith.constant 0 : i32
    %c0_i32_1 = arith.constant 0 : i32
    return %c0_i32, %c0_i32_0 : i32, i32
  }
  func.func @transform_3(%arg0: i32) -> (i32, i32) {
    %c0_i32 = arith.constant 0 : i32
    %c0_i32_0 = arith.constant 0 : i32
    return %arg0, %c0_i32 : i32, i32
  }
}

</mosaic_0001>

<llo_original>
// kernel: tpu_custom_call.1
$region0: #{tpu_custom_call.1}
  #allocation0 [shape = 'u32[]', space=smem, size = 0x4, offset = 0x4, fixed_abs, tag = 'smem constant byte address 0x4 - core index']
  #allocation1 [shape = 'u32[72,128]{1,0:T(1,128)}', space=vmem, size = 0x9000, scoped, tag = 'internal scratch']
  %s0 = inlined_call_operand.hbm [shape: f32[8,256], index: 0, kind: input, shape index: {}]
  %s1 = inlined_call_operand.hbm [shape: f32[256,128], index: 1, kind: input, shape index: {}]
  %s2 = inlined_call_operand.vmem [shape: f32[1,128], index: 2, kind: input, shape index: {}]
  %s3 = inlined_call_operand.hbm [shape: f32[8,128], index: 3, kind: output, shape index: {}]
  %s4 = sld [smem:[#allocation0]]
  $region30: #{tpu_custom_call.1} parent=0
    _
  %s6 = ssub.s32 1, %s4
  %s7 = scalar_select 0, %s6, %s4
  $region1: #{tpu_custom_call.1} parent=0
    #allocation2 [shape = 'u8[8192]{0}', space=vmem, size = 0x2000, scoped, tag = 'input window, operand 0, single buffered']
    #allocation3 [shape = 's32[1]{0}', space=sflag, size = 0x4, scoped, tag = 'scoped memory for tpu_custom_call.1']
    #allocation4 [shape = 's32[1]{0}', space=sflag, size = 0x4, scoped, tag = 'scoped memory for tpu_custom_call.1']
    #allocation5 [shape = 'u8[131072]{0}', space=vmem, size = 0x20000, scoped, tag = 'input window, operand 1, single buffered']
    #allocation6 [shape = 's32[1]{0}', space=sflag, size = 0x4, scoped, tag = 'scoped memory for tpu_custom_call.1']
    #allocation7 [shape = 'u8[4096]{0}', space=vmem, size = 0x1000, scoped, tag = 'output window, operand 0, single buffered']
    %8 = vsyncpa [#allocation3], 0
    %9 = vsyncpa [#allocation6], 0
    %10 = vsyncpa [#allocation4], 0
    // Predicated region
    $region2: #{tpu_custom_call.1} parent=1 // pred_check
      _
    $region3: #{tpu_custom_call.1} parent=1 // pred_check_branch
      %12 = sbr.rel (0) target = $region5
    $region4: #{tpu_custom_call.1} parent=1 // pred_region
      %14 = vsyncadd [#allocation3], 0
      %s16 = sshll.u32 %s0, 4
      %s17 = int_to_ptr.hbm [resolvable:$true] %s16
      %s18 = sshll.u32 [#allocation2], 4
      %s19 = int_to_ptr.vmem [resolvable:$true] %s18
      %21 = dma.hbm_to_vmem [thread:$0]  %s17, 256, %s19, [#allocation3]
    $region5: #{tpu_custom_call.1} parent=1 // pred_fallthru
      _
    // Predicated region
    $region6: #{tpu_custom_call.1} parent=1 // pred_check
      _
    $region7: #{tpu_custom_call.1} parent=1 // pred_check_branch
      %23 = sbr.rel (0) target = $region9
    $region8: #{tpu_custom_call.1} parent=1 // pred_region
      %25 = vsyncadd [#allocation6], 0
      %s26 = sshll.u32 %s1, 4
      %s27 = int_to_ptr.hbm [resolvable:$true] %s26
      %s28 = sshll.u32 [#allocation5], 4
      %s29 = int_to_ptr.vmem [resolvable:$true] %s28
      %34 = dma.hbm_to_vmem [thread:$0]  %s27, 4096, %s29, [#allocation6], 128, 128, 8
    $region9: #{tpu_custom_call.1} parent=1 // pred_fallthru
      _
    // Predicated region
    $region10: #{tpu_custom_call.1} parent=1 // pred_check
      _
    $region11: #{tpu_custom_call.1} parent=1 // pred_check_branch
      %36 = sbr.rel (0) target = $region13
    $region12: #{tpu_custom_call.1} parent=1 // pred_region
      _
    $region13: #{tpu_custom_call.1} parent=1 // pred_fallthru
      _
    // Predicated region
    $region14: #{tpu_custom_call.1} parent=1 // pred_check
      _
    $region15: #{tpu_custom_call.1} parent=1 // pred_check_branch
      %38 = sbr.rel (0) target = $region17
    $region16: #{tpu_custom_call.1} parent=1 // pred_region
      %40 = dma.done [#allocation3], 256
    $region17: #{tpu_custom_call.1} parent=1 // pred_fallthru
      _
    // Predicated region
    $region18: #{tpu_custom_call.1} parent=1 // pred_check
      _
    $region19: #{tpu_custom_call.1} parent=1 // pred_check_branch
      %42 = sbr.rel (0) target = $region21
    $region20: #{tpu_custom_call.1} parent=1 // pred_region
      %44 = dma.done [#allocation6], 4096
    $region21: #{tpu_custom_call.1} parent=1 // pred_fallthru
      _
    %v45 = vld [vmem:[#allocation2] sm:$0xff]
    %v46 = vld [vmem:[#allocation2 + $0x8] sm:$0xff]
    %v47 = vld [vmem:[#allocation5] sm:$0xff]
    %v48 = vld [vmem:[#allocation5 + $0x8] sm:$0xff]
    %v49 = vld [vmem:[#allocation5 + $0x10] sm:$0xff]
    %v50 = vld [vmem:[#allocation5 + $0x18] sm:$0xff]
    %v51 = vld [vmem:[#allocation5 + $0x20] sm:$0xff]
    %v52 = vld [vmem:[#allocation5 + $0x28] sm:$0xff]
    %v53 = vld [vmem:[#allocation5 + $0x30] sm:$0xff]
    %v54 = vld [vmem:[#allocation5 + $0x38] sm:$0xff]
    %v55 = vld [vmem:[#allocation5 + $0x40] sm:$0xff]
    %v56 = vld [vmem:[#allocation5 + $0x48] sm:$0xff]
    %v57 = vld [vmem:[#allocation5 + $0x50] sm:$0xff]
    %v58 = vld [vmem:[#allocation5 + $0x58] sm:$0xff]
    %v59 = vld [vmem:[#allocation5 + $0x60] sm:$0xff]
    %v60 = vld [vmem:[#allocation5 + $0x68] sm:$0xff]
    %v61 = vld [vmem:[#allocation5 + $0x70] sm:$0xff]
    %v62 = vld [vmem:[#allocation5 + $0x78] sm:$0xff]
    %v63 = vld [vmem:[#allocation5 + $0x80] sm:$0xff]
    %v64 = vld [vmem:[#allocation5 + $0x88] sm:$0xff]
    %v65 = vld [vmem:[#allocation5 + $0x90] sm:$0xff]
    %v66 = vld [vmem:[#allocation5 + $0x98] sm:$0xff]
    %v67 = vld [vmem:[#allocation5 + $0xa0] sm:$0xff]
    %v68 = vld [vmem:[#allocation5 + $0xa8] sm:$0xff]
    %v69 = vld [vmem:[#allocation5 + $0xb0] sm:$0xff]
    %v70 = vld [vmem:[#allocation5 + $0xb8] sm:$0xff]
    %v71 = vld [vmem:[#allocation5 + $0xc0] sm:$0xff]
    %v72 = vld [vmem:[#allocation5 + $0xc8] sm:$0xff]
    %v73 = vld [vmem:[#allocation5 + $0xd0] sm:$0xff]
    %v74 = vld [vmem:[#allocation5 + $0xd8] sm:$0xff]
    %v75 = vld [vmem:[#allocation5 + $0xe0] sm:$0xff]
    %v76 = vld [vmem:[#allocation5 + $0xe8] sm:$0xff]
    %v77 = vld [vmem:[#allocation5 + $0xf0] sm:$0xff]
    %v78 = vld [vmem:[#allocation5 + $0xf8] sm:$0xff]
    %v79 = vld [vmem:[%s2] sm:$0x1]
    %v81 = vperm.slane %v79, 0
    %83 = vmatpush.msra.mxu0 %v62
    %84 = vmatpush.msra.mxu0 %v61
    %85 = vmatpush.msra.mxu0 %v60
    %86 = vmatpush.msra.mxu0 %v59
    %87 = vmatpush.msra.mxu0 %v58
    %88 = vmatpush.msra.mxu0 %v57
    %89 = vmatpush.msra.mxu0 %v56
    %90 = vmatpush.msra.mxu0 %v55
    %91 = vmatpush.msra.mxu0 %v54
    %92 = vmatpush.msra.mxu0 %v53
    %93 = vmatpush.msra.mxu0 %v52
    %94 = vmatpush.msra.mxu0 %v51
    %95 = vmatpush.msra.mxu0 %v50
    %96 = vmatpush.msra.mxu0 %v49
    %97 = vmatpush.msra.mxu0 %v48
    %98 = vmatpush.msra.mxu0 %v47
    %99 = vmatmul.f32.gmra.mxu0 %v45
    %v100 = vpop.f32.mrf.mxu0
    %v101 = vadd.f32 %v81, %v100
    %102 = vdwg.mxu0
    %103 = vmatpush.msra.mxu0 %v78
    %104 = vmatpush.msra.mxu0 %v77
    %105 = vmatpush.msra.mxu0 %v76
    %106 = vmatpush.msra.mxu0 %v75
    %107 = vmatpush.msra.mxu0 %v74
    %108 = vmatpush.msra.mxu0 %v73
    %109 = vmatpush.msra.mxu0 %v72
    %110 = vmatpush.msra.mxu0 %v71
    %111 = vmatpush.msra.mxu0 %v70
    %112 = vmatpush.msra.mxu0 %v69
    %113 = vmatpush.msra.mxu0 %v68
    %114 = vmatpush.msra.mxu0 %v67
    %115 = vmatpush.msra.mxu0 %v66
    %116 = vmatpush.msra.mxu0 %v65
    %117 = vmatpush.msra.mxu0 %v64
    %118 = vmatpush.msra.mxu0 %v63
    %119 = vmatmul.f32.gmra.mxu0 %v46
    %v120 = vpop.f32.mrf.mxu0
    %v121 = vadd.f32 %v101, %v120
    %122 = vdwg.mxu0
    %123 = vst [vmem:[#allocation7] sm:$0xff] %v121
    // Predicated region
    $region22: #{tpu_custom_call.1} parent=1 // pred_check
      _
    $region23: #{tpu_custom_call.1} parent=1 // pred_check_branch
      %125 = sbr.rel (0) target = $region25
    $region24: #{tpu_custom_call.1} parent=1 // pred_region
      %127 = vsyncadd [#allocation4], 0
      %s129 = sshll.u32 [#allocation7], 4
      %s130 = int_to_ptr.vmem [resolvable:$true] %s129
      %s131 = sshll.u32 %s3, 4
      %s132 = int_to_ptr.hbm [resolvable:$true] %s131
      %134 = dma.vmem_to_hbm [thread:$0]  %s130, 128, %s132, [#allocation4]
    $region25: #{tpu_custom_call.1} parent=1 // pred_fallthru
      _
    // Predicated region
    $region26: #{tpu_custom_call.1} parent=1 // pred_check
      _
    $region27: #{tpu_custom_call.1} parent=1 // pred_check_branch
      %136 = sbr.rel (0) target = $region29
    $region28: #{tpu_custom_call.1} parent=1 // pred_region
      %138 = dma.done [#allocation4], 128
    $region29: #{tpu_custom_call.1} parent=1 // pred_fallthru
      _
    %139 = vsyncpa [#allocation3], 1
    %140 = vsyncpa [#allocation6], 1
    %141 = vsyncpa [#allocation4], 1

</llo_original>
